<compile_context>
chip_gen: v7x
topology: tpu7x:2x2x1
jax: 0.10.0
libtpu: 0.0.40
codegen_flags: <defaults>
</compile_context>

<pallas_src>
import functools

import numpy as np
import jax
import jax.numpy as jnp
from jax.experimental import pallas as pl
from jax.experimental.pallas import tpu as pltpu

LANES = 128      # lane width of a TPU vreg; last dim of every block
SUBLANES = 8     # f32 sublane count of a vreg


def _round_up(x, m):
    return ((x + m - 1) // m) * m


# ------------------------------- Pallas kernel -------------------------------
def _loss_kernel(x_ref, y_ref, o_ref, acc_ref, *,
                 block_rows, const_off, inv_batch):
    i = pl.program_id(0)

    @pl.when(i == 0)
    def _():
        acc_ref[...] = jnp.zeros_like(acc_ref)

    # z = (x - y).float()   (inputs already cast to f32 by the wrapper)
    z = x_ref[...] - y_ref[...]
    az = jnp.abs(z)
    small = az < 0.01
    mse = jnp.where(small, z, 0.0)            # (|z| <  0.01) * z
    l1_abs = jnp.where(small, 0.0, az)        # |(|z| >= 0.01) * z|
    # Per-element contribution; the constant -5e-5 per element is added once at
    # the end (const_off), so zero padding contributes exactly 0 here.
    contrib = 0.5 * (mse * mse) + 0.01 * l1_abs

    # VPU-only partial reduce: fold sublane groups into one (8,128) vreg.
    part = jnp.sum(contrib.reshape(block_rows // SUBLANES, SUBLANES, LANES),
                   axis=0)
    acc_ref[...] += part

    @pl.when(i == pl.num_programs(0) - 1)
    def _():
        total = jnp.sum(acc_ref[...], keepdims=True)          # (1, 1), XLU once
        o_ref[...] = ((total + const_off) * inv_batch).astype(o_ref.dtype)


# --------------------------------- wrapper -----------------------------------
def modified_smooth_l1_loss(x, y, *, max_block_rows=1024):
    """Exact Pallas equivalent of Modified_SmoothL1Loss.forward(x, y)."""
    assert x.shape == y.shape
    assert x.ndim >= 1 and x.shape[0] > 0
    batch = int(x.shape[0])
    n_elem = int(np.prod(x.shape))

    xf = jnp.ravel(x).astype(jnp.float32)
    yf = jnp.ravel(y).astype(jnp.float32)

    rows = -(-n_elem // LANES)                               # ceil-div
    block_rows = min(max_block_rows, _round_up(rows, SUBLANES))
    rows_p = _round_up(rows, block_rows)
    n_pad = rows_p * LANES - n_elem
    if n_pad:                                                # only pad when needed
        xf = jnp.pad(xf, (0, n_pad))                         # zeros -> zero contribution
        yf = jnp.pad(yf, (0, n_pad))
    x2 = xf.reshape(rows_p, LANES)
    y2 = yf.reshape(rows_p, LANES)

    kern = functools.partial(
        _loss_kernel,
        block_rows=block_rows,
        const_off=float(0.01 * (-0.005) * n_elem),           # -5e-5 * N
        inv_batch=1.0 / batch,
    )

    out = pl.pallas_call(
        kern,
        out_shape=jax.ShapeDtypeStruct((1, 1), jnp.float32),
        grid=(rows_p // block_rows,),
        in_specs=[
            pl.BlockSpec((block_rows, LANES), lambda i: (i, 0)),
            pl.BlockSpec((block_rows, LANES), lambda i: (i, 0)),
        ],
        out_specs=pl.BlockSpec((1, 1), lambda i: (0, 0)),
        scratch_shapes=[pltpu.VMEM((SUBLANES, LANES), jnp.float32)],
        compiler_params=pltpu.CompilerParams(
            dimension_semantics=("arbitrary",)),              # reduction axis
    )(x2, y2)
    return out[0, 0]


# ------------------------- pure-JAX reference (check) ------------------------
def _loss_ref(x, y):
    z = (x - y).astype(jnp.float32)
    az = jnp.abs(z)
    mse = jnp.where(az < 0.01, z, 0.0)
    l1 = jnp.where(az >= 0.01, z, 0.0)
    total = jnp.sum(0.5 * mse * mse) + jnp.sum(0.01 * (jnp.abs(l1) - 0.005))
    return total / z.shape[0]


# ----------------------------------- main ------------------------------------
if __name__ == "__main__":
    key = jax.random.PRNGKey(0)
    kx, ky, kx2, ky2 = jax.random.split(key, 4)

    # Small shapes; scale so both the |z| < 0.01 and |z| >= 0.01 branches fire.
    x = 0.02 * jax.random.normal(kx, (2, 4, 16, 16), jnp.float32)
    y = 0.02 * jax.random.normal(ky, (2, 4, 16, 16), jnp.float32)

    loss_fn = jax.jit(modified_smooth_l1_loss)

    loss = loss_fn(x, y)
    jax.block_until_ready(loss)
    np.testing.assert_allclose(np.asarray(loss), np.asarray(_loss_ref(x, y)),
                               rtol=1e-5, atol=1e-6)

    # Ragged element count (e.g. joint regression output (N, 14, 3)) exercises
    # the zero-padding path (padding contributes exactly 0 by construction).
    x2 = 0.02 * jax.random.normal(kx2, (2, 14, 3), jnp.float32)
    y2 = 0.02 * jax.random.normal(ky2, (2, 14, 3), jnp.float32)
    loss2 = loss_fn(x2, y2)
    jax.block_until_ready(loss2)
    np.testing.assert_allclose(np.asarray(loss2), np.asarray(_loss_ref(x2, y2)),
                               rtol=1e-5, atol=1e-6)

    assert loss.shape == () and loss.dtype == jnp.float32
    print("KERNEL_OK")
</pallas_src>

<mosaic_0001>
module attributes {stable_mosaic.version = 11 : i64} {
  func.func @_loss_kernel(%arg0: i32, %arg1: memref<16x128xf32, #tpu.memory_space<vmem>>, %arg2: memref<16x128xf32, #tpu.memory_space<vmem>>, %arg3: memref<1x1xf32, #tpu.memory_space<vmem>>, %arg4: memref<8x128xf32, #tpu.memory_space<vmem>>) attributes {dimension_semantics = [#tpu.dimension_semantics<arbitrary>], iteration_bounds = array<i64: 1>, scalar_prefetch = 0 : i64, scratch_operands = 1 : i64, tpu.core_type = #tpu.core_type<tc>, window_params = [{transform_indices = @transform_0, window_bounds = array<i64: 16, 128>}, {transform_indices = @transform_1, window_bounds = array<i64: 16, 128>}, {pipeline_mode = #tpu.pipeline_mode<synchronous>, transform_indices = @transform_2, window_bounds = array<i64: 1, 1>}]} {
    %c0_i32 = arith.constant 0 : i32
    %0 = arith.cmpi eq, %arg0, %c0_i32 : i32
    %1 = arith.extui %0 : i1 to i32
    %c0_i32_0 = arith.constant 0 : i32
    %2 = arith.cmpi ne, %1, %c0_i32_0 : i32
    scf.if %2 {
      %cst_15 = arith.constant 0.000000e+00 : f32
      %27 = vector.broadcast %cst_15 : f32 to vector<8x128xf32>
      %c0_16 = arith.constant 0 : index
      %c0_17 = arith.constant 0 : index
      %28 = vector.load %arg4[%c0_16, %c0_17] : memref<8x128xf32, #tpu.memory_space<vmem>>, vector<8x128xf32>
      tpu.vector_store %arg4[%c0_16, %c0_17], %27 {strides = array<i32>} : memref<8x128xf32, #tpu.memory_space<vmem>>, vector<8x128xf32>,
    } else {
    }
    %c0 = arith.constant 0 : index
    %c0_1 = arith.constant 0 : index
    %3 = vector.load %arg1[%c0, %c0_1] : memref<16x128xf32, #tpu.memory_space<vmem>>, vector<16x128xf32>
    %c0_2 = arith.constant 0 : index
    %c0_3 = arith.constant 0 : index
    %4 = vector.load %arg2[%c0_2, %c0_3] : memref<16x128xf32, #tpu.memory_space<vmem>>, vector<16x128xf32>
    %5 = arith.subf %3, %4 : vector<16x128xf32>
    %6 = math.absf %5 : vector<16x128xf32>
    %cst = arith.constant 0.00999999977 : f32
    %7 = vector.broadcast %cst : f32 to vector<16x128xf32>
    %8 = arith.cmpf olt, %6, %7 : vector<16x128xf32>
    %cst_4 = arith.constant 0.000000e+00 : f32
    %9 = vector.broadcast %cst_4 : f32 to vector<16x128xf32>
    %10 = arith.select %8, %5, %9 : vector<16x128xi1>, vector<16x128xf32>
    %cst_5 = arith.constant 0.000000e+00 : f32
    %11 = vector.broadcast %cst_5 : f32 to vector<16x128xf32>
    %12 = arith.select %8, %11, %6 : vector<16x128xi1>, vector<16x128xf32>
    %13 = arith.mulf %10, %10 : vector<16x128xf32>
    %cst_6 = arith.constant 5.000000e-01 : f32
    %14 = vector.broadcast %cst_6 : f32 to vector<16x128xf32>
    %15 = arith.mulf %14, %13 : vector<16x128xf32>
    %cst_7 = arith.constant 0.00999999977 : f32
    %16 = vector.broadcast %cst_7 : f32 to vector<16x128xf32>
    %17 = arith.mulf %16, %12 : vector<16x128xf32>
    %18 = arith.addf %15, %17 : vector<16x128xf32>
    %19 = vector.shape_cast %18 : vector<16x128xf32> to vector<2x8x128xf32>
    %cst_8 = arith.constant dense<0.000000e+00> : vector<8x128xf32>
    %20 = vector.multi_reduction <add>, %19, %cst_8 [0] : vector<2x8x128xf32> to vector<8x128xf32>
    %c0_9 = arith.constant 0 : index
    %c0_10 = arith.constant 0 : index
    %21 = vector.load %arg4[%c0_9, %c0_10] : memref<8x128xf32, #tpu.memory_space<vmem>>, vector<8x128xf32>
    %22 = arith.addf %21, %20 : vector<8x128xf32>
    %c0_11 = arith.constant 0 : index
    %c0_12 = arith.constant 0 : index
    %23 = vector.load %arg4[%c0_11, %c0_12] : memref<8x128xf32, #tpu.memory_space<vmem>>, vector<8x128xf32>
    tpu.vector_store %arg4[%c0_11, %c0_12], %22 {strides = array<i32>} : memref<8x128xf32, #tpu.memory_space<vmem>>, vector<8x128xf32>,
    %c0_i32_13 = arith.constant 0 : i32
    %24 = arith.cmpi eq, %arg0, %c0_i32_13 : i32
    %25 = arith.extui %24 : i1 to i32
    %c0_i32_14 = arith.constant 0 : i32
    %26 = arith.cmpi ne, %25, %c0_i32_14 : i32
    scf.if %26 {
      %c0_15 = arith.constant 0 : index
      %c0_16 = arith.constant 0 : index
      %27 = vector.load %arg4[%c0_15, %c0_16] : memref<8x128xf32, #tpu.memory_space<vmem>>, vector<8x128xf32>
      %28 = vector.shape_cast %27 : vector<8x128xf32> to vector<1x8x128xf32>
      %cst_17 = arith.constant dense<0.000000e+00> : vector<1xf32>
      %29 = vector.multi_reduction <add>, %28, %cst_17 [1, 2] : vector<1x8x128xf32> to vector<1xf32>
      %30 = vector.shape_cast %29 : vector<1xf32> to vector<1x1x1xf32>
      %31 = vector.extract %30[0, 0, 0] : f32 from vector<1x1x1xf32>
      %32 = vector.broadcast %31 : f32 to vector<1x1xf32>
      %cst_18 = arith.constant -1.024000e-01 : f32
      %33 = vector.broadcast %cst_18 : f32 to vector<1x1xf32>
      %34 = arith.addf %32, %33 : vector<1x1xf32>
      %cst_19 = arith.constant 5.000000e-01 : f32
      %35 = vector.broadcast %cst_19 : f32 to vector<1x1xf32>
      %36 = arith.mulf %34, %35 : vector<1x1xf32>
      %c0_20 = arith.constant 0 : index
      %c0_21 = arith.constant 0 : index
      %37 = vector.load %arg3[%c0_20, %c0_21] : memref<1x1xf32, #tpu.memory_space<vmem>>, vector<1x1xf32>
      tpu.vector_store %arg3[%c0_20, %c0_21], %36 {strides = array<i32>} : memref<1x1xf32, #tpu.memory_space<vmem>>, vector<1x1xf32>,
    } else {
    }
    return
  }
  func.func @transform_0(%arg0: i32) -> (i32, i32) {
    %c0_i32 = arith.constant 0 : i32
    %c0_i32_0 = arith.constant 0 : i32
    return %arg0, %c0_i32 : i32, i32
  }
  func.func @transform_1(%arg0: i32) -> (i32, i32) {
    %c0_i32 = arith.constant 0 : i32
    %c0_i32_0 = arith.constant 0 : i32
    return %arg0, %c0_i32 : i32, i32
  }
  func.func @transform_2(%arg0: i32) -> (i32, i32) {
    %c0_i32 = arith.constant 0 : i32
    %c0_i32_0 = arith.constant 0 : i32
    %c0_i32_1 = arith.constant 0 : i32
    return %c0_i32, %c0_i32_0 : i32, i32
  }
}

</mosaic_0001>

<llo_original>
// kernel: modified_smooth_l1_loss.1
$region0: #{modified_smooth_l1_loss.1}
  #allocation0 [shape = 'u32[]', space=smem, size = 0x4, offset = 0x4, fixed_abs, tag = 'smem constant byte address 0x4 - core index']
  #allocation1 [shape = 'u32[144,128]{1,0:T(1,128)}', space=vmem, size = 0x12000, scoped, tag = 'internal scratch']
  #allocation2 [shape = 'f32[8,128]{1,0:T(8,128)}', space=vmem, size = 0x1000, scoped, tag = 'scratch operand']
  %s0 = inlined_call_operand.vmem [shape: f32[16,128], index: 0, kind: input, shape index: {}]
  %s1 = inlined_call_operand.vmem [shape: f32[16,128], index: 1, kind: input, shape index: {}]
  %s2 = inlined_call_operand.hbm [shape: f32[1,1], index: 2, kind: output, shape index: {}]
  %s3 = sld [smem:[#allocation0]]
  $region26: #{modified_smooth_l1_loss.1} parent=0
    _
  %s5 = ssub.s32 1, %s3
  %s6 = scalar_select 0, %s5, %s3
  $region1: #{modified_smooth_l1_loss.1} parent=0
    #allocation3 [shape = 'u8[512]{0}', space=vmem, size = 0x400, scoped, tag = 'output window, operand 0, single buffered']
    #allocation4 [shape = 's32[1]{0}', space=sflag, size = 0x4, scoped, tag = 'scoped memory for modified_smooth_l1_loss.1']
    %7 = vsyncpa [#allocation4], 0
    // Predicated region
    $region2: #{modified_smooth_l1_loss.1} parent=1 // pred_check
      _
    $region3: #{modified_smooth_l1_loss.1} parent=1 // pred_check_branch
      %9 = sbr.rel (0) target = $region5
    $region4: #{modified_smooth_l1_loss.1} parent=1 // pred_region
      _
    $region5: #{modified_smooth_l1_loss.1} parent=1 // pred_fallthru
      _
    // Predicated region
    $region6: #{modified_smooth_l1_loss.1} parent=1 // pred_check
      _
    $region7: #{modified_smooth_l1_loss.1} parent=1 // pred_check_branch
      %11 = sbr.rel (0) target = $region9
    $region8: #{modified_smooth_l1_loss.1} parent=1 // pred_region
      _
    $region9: #{modified_smooth_l1_loss.1} parent=1 // pred_fallthru
      _
    %p12 = scmp.eq.s32.totalorder 0, 0
    // Predicated region
    $region10: #{modified_smooth_l1_loss.1} parent=1 // pred_check
      %p13 = pneg %p12
    $region11: #{modified_smooth_l1_loss.1} parent=1 // pred_check_branch
      %15 = sbr.rel (%p13) target = $region13
    $region12: #{modified_smooth_l1_loss.1} parent=1 // pred_region
      %16 = vst [vmem:[#allocation2] sm:$0xff] 0.0
    $region13: #{modified_smooth_l1_loss.1} parent=1 // pred_fallthru
      _
    %v17 = vld [vmem:[%s0] sm:$0xff]
    %v18 = vld [vmem:[%s0 + $0x8] sm:$0xff]
    %v19 = vld [vmem:[%s1] sm:$0xff]
    %v20 = vld [vmem:[%s1 + $0x8] sm:$0xff]
    %v21 = vsub.f32 %v17, %v19
    %v22 = vsub.f32 %v18, %v20
    %v23 = vand.u32 2147483647, %v21
    %v24 = vand.u32 2147483647, %v22
    %vm25 = vcmp.lt.f32.partialorder %v23, 0.01
    %vm26 = vcmp.lt.f32.partialorder %v24, 0.01
    %v27 = vsel %vm25, %v21, 0.0
    %v28 = vsel %vm26, %v22, 0.0
    %v29 = vsel %vm25, 0.0, %v23
    %v30 = vsel %vm26, 0.0, %v24
    %v31 = vmul.f32 %v27, %v27
    %v32 = vmul.f32 %v28, %v28
    %v33 = vmul.f32 %v31, 0.5
    %v34 = vmul.f32 %v32, 0.5
    %v35 = vmul.f32 %v29, 0.01
    %v36 = vmul.f32 %v30, 0.01
    %v37 = vadd.f32 %v33, %v35
    %v38 = vadd.f32 %v34, %v36
    %v39 = vadd.f32 %v37, %v38
    %v40 = vld [vmem:[#allocation2] sm:$0xff]
    %v41 = vadd.f32 %v40, %v39
    %42 = vst [vmem:[#allocation2] sm:$0xff] %v41
    // Predicated region
    $region14: #{modified_smooth_l1_loss.1} parent=1 // pred_check
      %p43 = pneg %p12
    $region15: #{modified_smooth_l1_loss.1} parent=1 // pred_check_branch
      %45 = sbr.rel (%p43) target = $region17
    $region16: #{modified_smooth_l1_loss.1} parent=1 // pred_region
      %v46 = vld [vmem:[#allocation2] sm:$0xff]
      %47 = vadd.xlane.f32.xlu0 %v46
      %v48 = vpop.xlane.xlu0 %47
      %v49 = vrot.slane %v48, 4
      %v50 = vadd.f32 %v48, %v49
      %v51 = vrot.slane %v50, 2
      %v52 = vadd.f32 %v50, %v51
      %v53 = vrot.slane %v52, 1
      %v54 = vadd.f32 %v52, %v53
      %s55 = vtos %v54
      %v56 = vstv %s55
      %v57 = vadd.f32 %v56, -0.1024
      %v58 = vmul.f32 %v57, 0.5
      %vm59 = vcmask 0
      %60 = vst.msk [vmem:[#allocation3] sm:$0x1] %vm59, %v58
    $region17: #{modified_smooth_l1_loss.1} parent=1 // pred_fallthru
      _
    // Predicated region
    $region18: #{modified_smooth_l1_loss.1} parent=1 // pred_check
      _
    $region19: #{modified_smooth_l1_loss.1} parent=1 // pred_check_branch
      %62 = sbr.rel (0) target = $region21
    $region20: #{modified_smooth_l1_loss.1} parent=1 // pred_region
      %s64 = ssub.s32 16, 16
      %65 = vsyncadd [#allocation4], %s64
      %s67 = sshll.u32 [#allocation3], 4
      %s68 = int_to_ptr.vmem [resolvable:$true] %s67
      %70 = dma.vmem_to_hbm [thread:$0]  %s68, 16, %s2, [#allocation4]
    $region21: #{modified_smooth_l1_loss.1} parent=1 // pred_fallthru
      _
    // Predicated region
    $region22: #{modified_smooth_l1_loss.1} parent=1 // pred_check
      _
    $region23: #{modified_smooth_l1_loss.1} parent=1 // pred_check_branch
      %72 = sbr.rel (0) target = $region25
    $region24: #{modified_smooth_l1_loss.1} parent=1 // pred_region
      %73 = dma.done [#allocation4], 16
    $region25: #{modified_smooth_l1_loss.1} parent=1 // pred_fallthru
      _
    %74 = vsyncpa [#allocation4], 1

</llo_original>
